<compile_context>
chip_gen: v7x
topology: tpu7x:2x2x1
jax: 0.10.0
libtpu: 0.0.40
codegen_flags: <defaults>
</compile_context>

<pallas_src>
import jax
import jax.numpy as jnp
from jax.experimental import pallas as pl
from jax.experimental.pallas import tpu as pltpu

_SUB = 16    # sublane granularity covering bf16 (16,128) and f32 (8,128) packing
_LANE = 128  # lane width


# --------------------------------------------------------------------------- #
# Kernel
# --------------------------------------------------------------------------- #
def decoder_kernel(x_ref, w1_ref, b1_ref, w2_ref, b2_ref, o_ref):
    # ---- Linear 1 (MXU, bf16 operands, f32 accumulate) + bias + ReLU (f32 VPU)
    h = jnp.dot(x_ref[...], w1_ref[...], preferred_element_type=jnp.float32)
    h = jnp.maximum(h + b1_ref[...], 0.0)                 # (tb, hidden) + (1, hidden)
    # ---- Linear 2 (activations back to bf16 for the MXU) + bias + Sigmoid (EUP)
    y = jnp.dot(h.astype(w2_ref.dtype), w2_ref[...],
                preferred_element_type=jnp.float32)
    o_ref[...] = jax.nn.sigmoid(y + b2_ref[...]).astype(o_ref.dtype)  # lane-dense store


# --------------------------------------------------------------------------- #
# One-time parameter packing (do NOT call per forward)
# --------------------------------------------------------------------------- #
def prepare_decoder_params(w1, b1, w2, b2):
    """Pack nn.Linear params once for the kernel.

    w1:(latent,hidden) w2:(hidden,out) stored as (in_features,out_features),
    so the kernel computes x @ W + b (same math as PyTorch's x @ W.T).
    Pads out_dim up to a multiple of 128 with zero columns (lane-dense stores),
    casts matmul operands to bf16 and biases to f32.  Returns (params, out_dim).
    """
    latent_dim, hidden = w1.shape
    out_dim = w2.shape[1]
    out_pad = pl.cdiv(out_dim, _LANE) * _LANE

    b1 = jnp.reshape(b1, (1, hidden)).astype(jnp.float32)
    b2 = jnp.reshape(b2, (1, out_dim)).astype(jnp.float32)
    if out_pad != out_dim:
        w2 = jnp.pad(w2, ((0, 0), (0, out_pad - out_dim)))
        b2 = jnp.pad(b2, ((0, 0), (0, out_pad - out_dim)))

    prepared = (w1.astype(jnp.bfloat16), b1, w2.astype(jnp.bfloat16), b2)
    return prepared, out_dim


# --------------------------------------------------------------------------- #
# Tiling heuristics
# --------------------------------------------------------------------------- #
def _choose_tb(batch, tb_max, tb_min=256):
    """Batch tile: multiple of 16, VMEM-safe, and sized so medium batches give
    >=2 (ideally >=4) grid steps (megacore / v7x 2-TC sharding) while large
    batches use big tiles (HBM roofline on v6e/v5e)."""
    b16 = pl.cdiv(batch, _SUB) * _SUB
    if b16 <= tb_min:
        return b16                                  # tiny batch: one small tile
    if b16 <= 2 * tb_min:
        return pl.cdiv(b16 // 2, _SUB) * _SUB       # two tiles, minimal padding
    tb = (b16 // 4) // _SUB * _SUB                  # aim for >= 4 grid steps
    return max(tb_min, min(tb_max, tb))


def _choose_tn(out_pad, tn_max):
    """Output-column tile: full width when small, else the largest multiple of
    128 <= tn_max that divides out_pad (bounds resident W2 / out VMEM on v7x)."""
    tn_max = max(_LANE, (tn_max // _LANE) * _LANE)
    if out_pad <= tn_max:
        return out_pad
    tn = tn_max
    while out_pad % tn:
        tn -= _LANE
    return tn


# --------------------------------------------------------------------------- #
# pallas_call builder
# --------------------------------------------------------------------------- #
def _build_decoder_call(Bp, latent_dim, hidden, out_pad, tb, tn, out_dtype,
                        single_buffer_weights):
    # Constant-index weights/biases: single-buffer them (halves resident VMEM).
    resident = (pl.Buffered(1)
                if (single_buffer_weights and hasattr(pl, "Buffered")) else None)
    # W2/b2 only have a constant index_map when there is a single column tile.
    w2_mode = resident if out_pad == tn else None

    n_btiles = Bp // tb
    n_ntiles = out_pad // tn
    out_isize = jnp.dtype(out_dtype).itemsize

    cost = pl.CostEstimate(
        flops=(2 * Bp * latent_dim * hidden * n_ntiles     # GEMM1 (redone per n tile)
               + 2 * Bp * hidden * out_pad),                # GEMM2
        transcendentals=Bp * out_pad,
        bytes_accessed=(Bp * latent_dim * 2 + latent_dim * hidden * 2 + hidden * 4
                        + hidden * out_pad * 2 + out_pad * 4
                        + Bp * out_pad * out_isize),
    )

    return pl.pallas_call(
        decoder_kernel,
        out_shape=jax.ShapeDtypeStruct((Bp, out_pad), out_dtype),
        grid_spec=pltpu.PrefetchScalarGridSpec(
            num_scalar_prefetch=0,
            grid=(n_btiles, n_ntiles),
            in_specs=[
                pl.BlockSpec((tb, latent_dim), lambda i, j: (i, 0)),        # x tile
                pl.BlockSpec((latent_dim, hidden), lambda i, j: (0, 0),
                             pipeline_mode=resident),                       # W1 (resident)
                pl.BlockSpec((1, hidden), lambda i, j: (0, 0),
                             pipeline_mode=resident),                       # b1 (resident)
                pl.BlockSpec((hidden, tn), lambda i, j: (0, j),
                             pipeline_mode=w2_mode),                        # W2 column tile
                pl.BlockSpec((1, tn), lambda i, j: (0, j),
                             pipeline_mode=w2_mode),                        # b2 column tile
            ],
            out_specs=pl.BlockSpec((tb, tn), lambda i, j: (i, j)),          # lane-dense out
        ),
        compiler_params=pltpu.CompilerParams(
            dimension_semantics=("parallel", "parallel"),
            # Per-step VMEM is bounded by (tb, tn) tiles plus a W2 column tile,
            # so the 32 MiB scoped defaults (v6e/v7x) are comfortable even at
            # large out_dim thanks to the n-tiling above.
        ),
        cost_estimate=cost,
    )


# --------------------------------------------------------------------------- #
# Forward
# --------------------------------------------------------------------------- #
def _decoder_xla(x, prepared, out_dim, out_dtype):
    """Fused XLA path for tiny problems where pallas_call launch overhead dominates."""
    w1, b1, w2, b2 = prepared
    h = jnp.maximum(
        jnp.dot(x.astype(w1.dtype), w1, preferred_element_type=jnp.float32) + b1, 0.0)
    y = jnp.dot(h.astype(w2.dtype), w2, preferred_element_type=jnp.float32) + b2
    return jax.nn.sigmoid(y)[:, :out_dim].astype(out_dtype)


def decoder_forward(x, prepared, out_dim, *, tb_max=2048, tn_max=4096,
                    out_dtype=None, xla_fallback_max_rows=0):
    """x:(B, latent) ; prepared = prepare_decoder_params(...)[0] ; out_dim static int.

    out_dtype=jnp.bfloat16 halves the dominant output HBM stream if downstream
    tolerates bf16 (default keeps x.dtype for PyTorch-parity semantics).
    """
    w1, b1, w2, b2 = prepared
    B, latent_dim = x.shape
    hidden = w1.shape[1]
    out_pad = w2.shape[1]
    out_dtype = x.dtype if out_dtype is None else out_dtype

    # Optional small-problem fallback (disabled by default).
    if xla_fallback_max_rows and B <= xla_fallback_max_rows:
        return _decoder_xla(x, prepared, out_dim, out_dtype)

    tb = _choose_tb(B, tb_max)
    tn = _choose_tn(out_pad, tn_max)
    Bp = pl.cdiv(B, tb) * tb

    # Cast first, pad second: XLA fuses the bf16 convert into the pad, so x is
    # touched in HBM once (at bf16 width) before the kernel.
    x_bf = x.astype(jnp.bfloat16)
    if Bp != B:
        x_bf = jnp.pad(x_bf, ((0, Bp - B), (0, 0)))

    args = (x_bf, w1, b1, w2, b2)
    try:
        out = _build_decoder_call(Bp, latent_dim, hidden, out_pad, tb, tn,
                                  out_dtype, single_buffer_weights=True)(*args)
    except Exception:
        # Safe fallback if this jax build rejects Buffered(1) single-buffering.
        out = _build_decoder_call(Bp, latent_dim, hidden, out_pad, tb, tn,
                                  out_dtype, single_buffer_weights=False)(*args)

    # Padded lanes hold sigmoid(0)=0.5 and padded rows are garbage: the raw
    # (Bp, out_pad) buffer must never be consumed without this slice.
    return out[:B, :out_dim]


# --------------------------------------------------------------------------- #
# Deterministic PyTorch-style init + demo
# --------------------------------------------------------------------------- #
def init_params(key, latent_dim, out_dim, dtype=jnp.float32):
    """PyTorch nn.Linear init (uniform +-1/sqrt(fan_in)); weights stored (in, out)."""
    hidden = latent_dim * 4
    k1, k2, k3, k4 = jax.random.split(key, 4)
    lim1 = 1.0 / jnp.sqrt(latent_dim)
    lim2 = 1.0 / jnp.sqrt(hidden)
    w1 = jax.random.uniform(k1, (latent_dim, hidden), dtype, -lim1, lim1)
    b1 = jax.random.uniform(k2, (1, hidden), dtype, -lim1, lim1)
    w2 = jax.random.uniform(k3, (hidden, out_dim), dtype, -lim2, lim2)
    b2 = jax.random.uniform(k4, (1, out_dim), dtype, -lim2, lim2)
    return w1, b1, w2, b2


if __name__ == "__main__":
    # Small shapes implied by the module: batch=8, latent_dim=32 -> hidden=128,
    # out_dim=64 (padded to 128 lanes once, inside prepare_decoder_params).
    B, latent_dim, out_dim = 8, 32, 64
    key = jax.random.PRNGKey(0)
    kx, kp = jax.random.split(key)
    x = jax.random.normal(kx, (B, latent_dim), jnp.float32)
    w1, b1, w2, b2 = init_params(kp, latent_dim, out_dim)

    # One-time weight packing (hoisted out of the per-call path).
    prepared, out_dim_p = prepare_decoder_params(w1, b1, w2, b2)

    out = jax.block_until_ready(decoder_forward(x, prepared, out_dim_p))

    # Pure-JAX f32 reference (tolerance accounts for bf16 matmul operands).
    h_ref = jnp.maximum(x @ w1 + b1, 0.0)
    ref = jax.nn.sigmoid(h_ref @ w2 + b2)
    assert out.shape == (B, out_dim)
    assert out.dtype == x.dtype
    assert jnp.allclose(out, ref, atol=2e-2, rtol=2e-2), \
        float(jnp.max(jnp.abs(out - ref)))

    # Also exercise the bf16-output (half output-HBM-traffic) variant.
    out_bf16 = jax.block_until_ready(
        decoder_forward(x, prepared, out_dim_p, out_dtype=jnp.bfloat16))
    assert out_bf16.dtype == jnp.bfloat16
    assert jnp.allclose(out_bf16.astype(jnp.float32), ref, atol=3e-2, rtol=3e-2), \
        float(jnp.max(jnp.abs(out_bf16.astype(jnp.float32) - ref)))

    print("KERNEL_OK")
</pallas_src>

<mosaic_0001>
module attributes {stable_mosaic.version = 11 : i64} {
  func.func @decoder_kernel(%arg0: i32, %arg1: i32, %arg2: memref<16x32xbf16, #tpu.memory_space<vmem>>, %arg3: memref<32x128xbf16, #tpu.memory_space<vmem>>, %arg4: memref<1x128xf32, #tpu.memory_space<vmem>>, %arg5: memref<128x128xbf16, #tpu.memory_space<vmem>>, %arg6: memref<1x128xf32, #tpu.memory_space<vmem>>, %arg7: memref<16x128xf32, #tpu.memory_space<vmem>>) attributes {dimension_semantics = [#tpu.dimension_semantics<parallel>, #tpu.dimension_semantics<parallel>], iteration_bounds = array<i64: 1, 1>, scalar_prefetch = 0 : i64, scratch_operands = 0 : i64, tpu.core_type = #tpu.core_type<tc>, window_params = [{transform_indices = @transform_0, window_bounds = array<i64: 16, 32>}, {pipeline_mode = #tpu.pipeline_mode<synchronous>, transform_indices = @transform_1, window_bounds = array<i64: 32, 128>}, {pipeline_mode = #tpu.pipeline_mode<synchronous>, transform_indices = @transform_2, window_bounds = array<i64: 1, 128>}, {pipeline_mode = #tpu.pipeline_mode<synchronous>, transform_indices = @transform_3, window_bounds = array<i64: 128, 128>}, {pipeline_mode = #tpu.pipeline_mode<synchronous>, transform_indices = @transform_4, window_bounds = array<i64: 1, 128>}, {transform_indices = @transform_5, window_bounds = array<i64: 16, 128>}]} {
    %c0 = arith.constant 0 : index
    %c0_0 = arith.constant 0 : index
    %0 = vector.load %arg2[%c0, %c0_0] : memref<16x32xbf16, #tpu.memory_space<vmem>>, vector<16x32xbf16>
    %c0_1 = arith.constant 0 : index
    %c0_2 = arith.constant 0 : index
    %1 = vector.load %arg3[%c0_1, %c0_2] : memref<32x128xbf16, #tpu.memory_space<vmem>>, vector<32x128xbf16>
    %cst = arith.constant dense<0.000000e+00> : vector<16x128xf32>
    %2 = tpu.matmul %0, %1, %cst {dimension_numbers = #tpu.dot_dimension_numbers<[1], [0], [0], [1], [0, 0, 1, 1], [], []>} : vector<16x32xbf16>, vector<32x128xbf16>, vector<16x128xf32> -> vector<16x128xf32>
    %c0_3 = arith.constant 0 : index
    %c0_4 = arith.constant 0 : index
    %3 = vector.load %arg4[%c0_3, %c0_4] : memref<1x128xf32, #tpu.memory_space<vmem>>, vector<1x128xf32>
    %4 = vector.broadcast %3 : vector<1x128xf32> to vector<16x128xf32>
    %5 = arith.addf %2, %4 : vector<16x128xf32>
    %cst_5 = arith.constant 0.000000e+00 : f32
    %6 = vector.broadcast %cst_5 : f32 to vector<16x128xf32>
    %7 = arith.maximumf %5, %6 : vector<16x128xf32>
    %8 = arith.truncf %7 : vector<16x128xf32> to vector<16x128xbf16>
    %c0_6 = arith.constant 0 : index
    %c0_7 = arith.constant 0 : index
    %9 = vector.load %arg5[%c0_6, %c0_7] : memref<128x128xbf16, #tpu.memory_space<vmem>>, vector<128x128xbf16>
    %cst_8 = arith.constant dense<0.000000e+00> : vector<16x128xf32>
    %10 = tpu.matmul %8, %9, %cst_8 {dimension_numbers = #tpu.dot_dimension_numbers<[1], [0], [0], [1], [0, 0, 1, 1], [], []>} : vector<16x128xbf16>, vector<128x128xbf16>, vector<16x128xf32> -> vector<16x128xf32>
    %c0_9 = arith.constant 0 : index
    %c0_10 = arith.constant 0 : index
    %11 = vector.load %arg6[%c0_9, %c0_10] : memref<1x128xf32, #tpu.memory_space<vmem>>, vector<1x128xf32>
    %12 = vector.broadcast %11 : vector<1x128xf32> to vector<16x128xf32>
    %13 = arith.addf %10, %12 : vector<16x128xf32>
    %14 = arith.negf %13 : vector<16x128xf32>
    %15 = math.exp %14 : vector<16x128xf32>
    %cst_11 = arith.constant 1.000000e+00 : f32
    %16 = vector.broadcast %cst_11 : f32 to vector<16x128xf32>
    %17 = arith.addf %16, %15 : vector<16x128xf32>
    %18 = arith.divf %16, %17 : vector<16x128xf32>
    %c0_12 = arith.constant 0 : index
    %c0_13 = arith.constant 0 : index
    %19 = vector.load %arg7[%c0_12, %c0_13] : memref<16x128xf32, #tpu.memory_space<vmem>>, vector<16x128xf32>
    tpu.vector_store %arg7[%c0_12, %c0_13], %18 {strides = array<i32>} : memref<16x128xf32, #tpu.memory_space<vmem>>, vector<16x128xf32>,
    return
  }
  func.func @transform_0(%arg0: i32, %arg1: i32) -> (i32, i32) {
    %c0_i32 = arith.constant 0 : i32
    %c0_i32_0 = arith.constant 0 : i32
    return %arg0, %c0_i32 : i32, i32
  }
  func.func @transform_1(%arg0: i32, %arg1: i32) -> (i32, i32) {
    %c0_i32 = arith.constant 0 : i32
    %c0_i32_0 = arith.constant 0 : i32
    %c0_i32_1 = arith.constant 0 : i32
    return %c0_i32, %c0_i32_0 : i32, i32
  }
  func.func @transform_2(%arg0: i32, %arg1: i32) -> (i32, i32) {
    %c0_i32 = arith.constant 0 : i32
    %c0_i32_0 = arith.constant 0 : i32
    %c0_i32_1 = arith.constant 0 : i32
    return %c0_i32, %c0_i32_0 : i32, i32
  }
  func.func @transform_3(%arg0: i32, %arg1: i32) -> (i32, i32) {
    %c0_i32 = arith.constant 0 : i32
    %c0_i32_0 = arith.constant 0 : i32
    return %c0_i32, %arg1 : i32, i32
  }
  func.func @transform_4(%arg0: i32, %arg1: i32) -> (i32, i32) {
    %c0_i32 = arith.constant 0 : i32
    %c0_i32_0 = arith.constant 0 : i32
    return %c0_i32, %arg1 : i32, i32
  }
  func.func @transform_5(%arg0: i32, %arg1: i32) -> (i32, i32) {
    %c0_i32 = arith.constant 0 : i32
    return %arg0, %arg1 : i32, i32
  }
}

module attributes {stable_mosaic.version = 11 : i64} {
  func.func @decoder_kernel(%arg0: i32, %arg1: i32, %arg2: memref<16x32xbf16, #tpu.memory_space<vmem>>, %arg3: memref<32x128xbf16, #tpu.memory_space<vmem>>, %arg4: memref<1x128xf32, #tpu.memory_space<vmem>>, %arg5: memref<128x128xbf16, #tpu.memory_space<vmem>>, %arg6: memref<1x128xf32, #tpu.memory_space<vmem>>, %arg7: memref<16x128xf32, #tpu.memory_space<vmem>>) attributes {dimension_semantics = [#tpu.dimension_semantics<parallel>, #tpu.dimension_semantics<parallel>], iteration_bounds = array<i64: 1, 1>, scalar_prefetch = 0 : i64, scratch_operands = 0 : i64, tpu.core_type = #tpu.core_type<tc>, window_params = [{transform_indices = @transform_0, window_bounds = array<i64: 16, 32>}, {pipeline_mode = #tpu.pipeline_mode<synchronous>, transform_indices = @transform_1, window_bounds = array<i64: 32, 128>}, {pipeline_mode = #tpu.pipeline_mode<synchronous>, transform_indices = @transform_2, window_bounds = array<i64: 1, 128>}, {transform_indices = @transform_3, window_bounds = array<i64: 128, 128>}, {transform_indices = @transform_4, window_bounds = array<i64: 1, 128>}, {transform_indices = @transform_5, window_bounds = array<i64: 16, 128>}]} {
    %c0 = arith.constant 0 : index
    %c0_0 = arith.constant 0 : index
    %0 = vector.load %arg2[%c0, %c0_0] : memref<16x32xbf16, #tpu.memory_space<vmem>>, vector<16x32xbf16>
    %c0_1 = arith.constant 0 : index
    %c0_2 = arith.constant 0 : index
    %1 = vector.load %arg3[%c0_1, %c0_2] : memref<32x128xbf16, #tpu.memory_space<vmem>>, vector<32x128xbf16>
    %cst = arith.constant dense<0.000000e+00> : vector<16x128xf32>
    %2 = tpu.matmul %0, %1, %cst {dimension_numbers = #tpu.dot_dimension_numbers<[1], [0], [0], [1], [0, 0, 1, 1], [], []>} : vector<16x32xbf16>, vector<32x128xbf16>, vector<16x128xf32> -> vector<16x128xf32>
    %c0_3 = arith.constant 0 : index
    %c0_4 = arith.constant 0 : index
    %3 = vector.load %arg4[%c0_3, %c0_4] : memref<1x128xf32, #tpu.memory_space<vmem>>, vector<1x128xf32>
    %4 = vector.broadcast %3 : vector<1x128xf32> to vector<16x128xf32>
    %5 = arith.addf %2, %4 : vector<16x128xf32>
    %cst_5 = arith.constant 0.000000e+00 : f32
    %6 = vector.broadcast %cst_5 : f32 to vector<16x128xf32>
    %7 = arith.maximumf %5, %6 : vector<16x128xf32>
    %8 = arith.truncf %7 : vector<16x128xf32> to vector<16x128xbf16>
    %c0_6 = arith.constant 0 : index
    %c0_7 = arith.constant 0 : index
    %9 = vector.load %arg5[%c0_6, %c0_7] : memref<128x128xbf16, #tpu.memory_space<vmem>>, vector<128x128xbf16>
    %cst_8 = arith.constant dense<0.000000e+00> : vector<16x128xf32>
    %10 = tpu.matmul %8, %9, %cst_8 {dimension_numbers = #tpu.dot_dimension_numbers<[1], [0], [0], [1], [0, 0, 1, 1], [], []>} : vector<16x128xbf16>, vector<128x128xbf16>, vector<16x128xf32> -> vector<16x128xf32>
    %c0_9 = arith.constant 0 : index
    %c0_10 = arith.constant 0 : index
    %11 = vector.load %arg6[%c0_9, %c0_10] : memref<1x128xf32, #tpu.memory_space<vmem>>, vector<1x128xf32>
    %12 = vector.broadcast %11 : vector<1x128xf32> to vector<16x128xf32>
    %13 = arith.addf %10, %12 : vector<16x128xf32>
    %14 = arith.negf %13 : vector<16x128xf32>
    %15 = math.exp %14 : vector<16x128xf32>
    %cst_11 = arith.constant 1.000000e+00 : f32
    %16 = vector.broadcast %cst_11 : f32 to vector<16x128xf32>
    %17 = arith.addf %16, %15 : vector<16x128xf32>
    %18 = arith.divf %16, %17 : vector<16x128xf32>
    %c0_12 = arith.constant 0 : index
    %c0_13 = arith.constant 0 : index
    %19 = vector.load %arg7[%c0_12, %c0_13] : memref<16x128xf32, #tpu.memory_space<vmem>>, vector<16x128xf32>
    tpu.vector_store %arg7[%c0_12, %c0_13], %18 {strides = array<i32>} : memref<16x128xf32, #tpu.memory_space<vmem>>, vector<16x128xf32>,
    return
  }
  func.func @transform_0(%arg0: i32, %arg1: i32) -> (i32, i32) {
    %c0_i32 = arith.constant 0 : i32
    %c0_i32_0 = arith.constant 0 : i32
    return %arg0, %c0_i32 : i32, i32
  }
  func.func @transform_1(%arg0: i32, %arg1: i32) -> (i32, i32) {
    %c0_i32 = arith.constant 0 : i32
    %c0_i32_0 = arith.constant 0 : i32
    %c0_i32_1 = arith.constant 0 : i32
    return %c0_i32, %c0_i32_0 : i32, i32
  }
  func.func @transform_2(%arg0: i32, %arg1: i32) -> (i32, i32) {
    %c0_i32 = arith.constant 0 : i32
    %c0_i32_0 = arith.constant 0 : i32
    %c0_i32_1 = arith.constant 0 : i32
    return %c0_i32, %c0_i32_0 : i32, i32
  }
  func.func @transform_3(%arg0: i32, %arg1: i32) -> (i32, i32) {
    %c0_i32 = arith.constant 0 : i32
    %c0_i32_0 = arith.constant 0 : i32
    return %c0_i32, %arg1 : i32, i32
  }
  func.func @transform_4(%arg0: i32, %arg1: i32) -> (i32, i32) {
    %c0_i32 = arith.constant 0 : i32
    %c0_i32_0 = arith.constant 0 : i32
    return %c0_i32, %arg1 : i32, i32
  }
  func.func @transform_5(%arg0: i32, %arg1: i32) -> (i32, i32) {
    %c0_i32 = arith.constant 0 : i32
    return %arg0, %arg1 : i32, i32
  }
}

</mosaic_0001>

<llo_original>
// kernel: tpu_custom_call.1
$region0: #{tpu_custom_call.1}
  #allocation0 [shape = 'u32[]', space=smem, size = 0x4, offset = 0x4, fixed_abs, tag = 'smem constant byte address 0x4 - core index']
  #allocation1 [shape = 'u32[144,128]{1,0:T(1,128)}', space=vmem, size = 0x12000, scoped, tag = 'internal scratch']
  %s0 = inlined_call_operand.hbm [shape: bf16[16,32], index: 0, kind: input, shape index: {}]
  %s1 = inlined_call_operand.hbm [shape: bf16[32,128], index: 1, kind: input, shape index: {}]
  %s2 = inlined_call_operand.vmem [shape: f32[1,128], index: 2, kind: input, shape index: {}]
  %s3 = inlined_call_operand.hbm [shape: bf16[128,128], index: 3, kind: input, shape index: {}]
  %s4 = inlined_call_operand.vmem [shape: f32[1,128], index: 4, kind: input, shape index: {}]
  %s5 = inlined_call_operand.hbm [shape: f32[16,128], index: 5, kind: output, shape index: {}]
  %s6 = sld [smem:[#allocation0]]
  $region42: #{tpu_custom_call.1} parent=0
    _
  %s8 = ssub.s32 1, %s6
  %s9 = scalar_select 0, %s8, %s6
  $region1: #{tpu_custom_call.1} parent=0
    #allocation2 [shape = 'u8[4096]{0}', space=vmem, size = 0x1000, scoped, tag = 'input window, operand 0, single buffered']
    #allocation3 [shape = 's32[1]{0}', space=sflag, size = 0x4, scoped, tag = 'scoped memory for tpu_custom_call.1']
    #allocation4 [shape = 's32[1]{0}', space=sflag, size = 0x4, scoped, tag = 'scoped memory for tpu_custom_call.1']
    #allocation5 [shape = 'u8[8192]{0}', space=vmem, size = 0x2000, scoped, tag = 'input window, operand 1, single buffered']
    #allocation6 [shape = 's32[1]{0}', space=sflag, size = 0x4, scoped, tag = 'scoped memory for tpu_custom_call.1']
    #allocation7 [shape = 'u8[32768]{0}', space=vmem, size = 0x8000, scoped, tag = 'input window, operand 3, single buffered']
    #allocation8 [shape = 'u8[8192]{0}', space=vmem, size = 0x2000, scoped, tag = 'output window, operand 0, single buffered']
    %10 = vsyncpa [#allocation3], 0
    %11 = vsyncpa [#allocation6], 0
    %12 = vsyncpa [#allocation4], 0
    // Predicated region
    $region2: #{tpu_custom_call.1} parent=1 // pred_check
      _
    $region3: #{tpu_custom_call.1} parent=1 // pred_check_branch
      %14 = sbr.rel (0) target = $region5
    $region4: #{tpu_custom_call.1} parent=1 // pred_region
      %s16 = ssub.s32 128, 128
      %17 = vsyncadd [#allocation3], %s16
      %s18 = sshll.u32 [#allocation2], 4
      %s19 = int_to_ptr.vmem [resolvable:$true] %s18
      %24 = dma.hbm_to_vmem [thread:$0]  %s0, 128, %s19, [#allocation3], 64, 64, 4
    $region5: #{tpu_custom_call.1} parent=1 // pred_fallthru
      _
    // Predicated region
    $region6: #{tpu_custom_call.1} parent=1 // pred_check
      _
    $region7: #{tpu_custom_call.1} parent=1 // pred_check_branch
      %26 = sbr.rel (0) target = $region9
    $region8: #{tpu_custom_call.1} parent=1 // pred_region
      %s28 = ssub.s32 256, 256
      %29 = vsyncadd [#allocation6], %s28
      %s30 = sshll.u32 [#allocation5], 4
      %s31 = int_to_ptr.vmem [resolvable:$true] %s30
      %36 = dma.hbm_to_vmem [thread:$0]  %s1, 256, %s31, [#allocation6], 64, 64, 4
    $region9: #{tpu_custom_call.1} parent=1 // pred_fallthru
      _
    // Predicated region
    $region10: #{tpu_custom_call.1} parent=1 // pred_check
      _
    $region11: #{tpu_custom_call.1} parent=1 // pred_check_branch
      %38 = sbr.rel (0) target = $region13
    $region12: #{tpu_custom_call.1} parent=1 // pred_region
      _
    $region13: #{tpu_custom_call.1} parent=1 // pred_fallthru
      _
    // Predicated region
    $region14: #{tpu_custom_call.1} parent=1 // pred_check
      _
    $region15: #{tpu_custom_call.1} parent=1 // pred_check_branch
      %40 = sbr.rel (0) target = $region17
    $region16: #{tpu_custom_call.1} parent=1 // pred_region
      %s42 = ssub.s32 1024, 1024
      %43 = vsyncadd [#allocation6], %s42
      %s44 = sshll.u32 [#allocation7], 4
      %s45 = int_to_ptr.vmem [resolvable:$true] %s44
      %50 = dma.hbm_to_vmem [thread:$0]  %s3, 1024, %s45, [#allocation6], 64, 64, 4
    $region17: #{tpu_custom_call.1} parent=1 // pred_fallthru
      _
    // Predicated region
    $region18: #{tpu_custom_call.1} parent=1 // pred_check
      _
    $region19: #{tpu_custom_call.1} parent=1 // pred_check_branch
      %52 = sbr.rel (0) target = $region21
    $region20: #{tpu_custom_call.1} parent=1 // pred_region
      _
    $region21: #{tpu_custom_call.1} parent=1 // pred_fallthru
      _
    // Predicated region
    $region22: #{tpu_custom_call.1} parent=1 // pred_check
      _
    $region23: #{tpu_custom_call.1} parent=1 // pred_check_branch
      %54 = sbr.rel (0) target = $region25
    $region24: #{tpu_custom_call.1} parent=1 // pred_region
      %55 = dma.done [#allocation3], 128
    $region25: #{tpu_custom_call.1} parent=1 // pred_fallthru
      _
    // Predicated region
    $region26: #{tpu_custom_call.1} parent=1 // pred_check
      _
    $region27: #{tpu_custom_call.1} parent=1 // pred_check_branch
      %57 = sbr.rel (0) target = $region29
    $region28: #{tpu_custom_call.1} parent=1 // pred_region
      %58 = dma.done [#allocation6], 256
    $region29: #{tpu_custom_call.1} parent=1 // pred_fallthru
      _
    // Predicated region
    $region30: #{tpu_custom_call.1} parent=1 // pred_check
      _
    $region31: #{tpu_custom_call.1} parent=1 // pred_check_branch
      %60 = sbr.rel (0) target = $region33
    $region32: #{tpu_custom_call.1} parent=1 // pred_region
      %61 = dma.done [#allocation6], 1024
    $region33: #{tpu_custom_call.1} parent=1 // pred_fallthru
      _
    %v63 = vld [vmem:[#allocation2] sm:$0xf]
    %v64 = vld [vmem:[#allocation2 + $0x4] sm:$0xf]
    %v65 = vld [vmem:[#allocation5] sm:$0xf]
    %v66 = vld [vmem:[#allocation5 + $0x4] sm:$0xf]
    %v67 = vld [vmem:[#allocation5 + $0x8] sm:$0xf]
    %v68 = vld [vmem:[#allocation5 + $0xc] sm:$0xf]
    %v69 = vld [vmem:[%s2] sm:$0x1]
    %v71 = vlaneseq
    %v72 = vshrl.u32 %v71, 7
    %v73 = vsub.s32 0, %v72
    %v74 = vrot.slane %v69, %v73
    %v78 = vunpack.c.l.b16 %v63
    %v79 = vunpack.c.l.b16 %v64
    %v80 = vpack.c.b16 %v79, %v78
    %v85 = vunpack.c.l.b16 %v65
    %v86 = vunpack.c.l.b16 %v66
    %v87 = vunpack.c.l.b16 %v67
    %v88 = vunpack.c.l.b16 %v68
    %v89 = vpack.c.b16 %v86, %v85
    %v90 = vpack.c.b16 %v88, %v87
    %vm93 = vcmask 261120
    %v95 = vsel %vm93, %v80, 0
    %97 = vmatprep.subr.bf16.mxu0 0
    %98 = vmatpush1.bf16.msra.mxu0 %v89
    %99 = vmatprep.subr.bf16.mxu0 0
    %100 = vmatpush1.bf16.msra.mxu0 %v90
    %101 = vmatprep.subr.bf16.mxu0 0
    %102 = vmatpush1.bf16.msra.mxu0 0
    %103 = vmatprep.subr.bf16.mxu0 0
    %104 = vmatpush1.bf16.msra.mxu0 0
    %105 = vmatprep.subr.bf16.mxu0 0
    %106 = vmatpush1.bf16.msra.mxu0 0
    %107 = vmatprep.subr.bf16.mxu0 0
    %108 = vmatpush1.bf16.msra.mxu0 0
    %109 = vmatprep.subr.bf16.mxu0 0
    %110 = vmatpush1.bf16.msra.mxu0 0
    %111 = vmatprep.subr.bf16.mxu0 0
    %112 = vmatpush1.bf16.msra.mxu0 0
    %113 = vmatprep.subr.bf16.mxu0 0
    %114 = vmatpush1.bf16.msra.mxu0 0
    %115 = vmatprep.subr.bf16.mxu0 0
    %116 = vmatpush1.bf16.msra.mxu0 0
    %117 = vmatprep.subr.bf16.mxu0 0
    %118 = vmatpush1.bf16.msra.mxu0 0
    %119 = vmatprep.subr.bf16.mxu0 0
    %120 = vmatpush1.bf16.msra.mxu0 0
    %121 = vmatprep.subr.bf16.mxu0 0
    %122 = vmatpush1.bf16.msra.mxu0 0
    %123 = vmatprep.subr.bf16.mxu0 0
    %124 = vmatpush1.bf16.msra.mxu0 0
    %125 = vmatprep.subr.bf16.mxu0 0
    %126 = vmatpush1.bf16.msra.mxu0 0
    %127 = vmatprep.subr.bf16.mxu0 0
    %128 = vmatpush1.bf16.msra.mxu0 0
    %129 = vmatprep.mubr.bf16.mxu0 0
    %130 = vmatmul.mubr.bf16.gmra.mrb[0].mxu0 %v95
    %v131 = vpop.f32.mrb[0].mxu0
    %v132 = vadd.f32 %v74, %v131
    %v133 = vpop.f32.mrb[0].mxu0
    %v134 = vpop.f32.mrb[0].mxu0
    %v135 = vadd.f32 %v74, %v134
    %v136 = vpop.f32.mrb[0].mxu0
    %137 = vdwg.mxu0
    %v138 = vmax.f32 %v132, 0.0
    %v139 = vmax.f32 %v135, 0.0
    %v140 = vpack.c.bf16 %v139, %v138
    %v141 = vld [vmem:[#allocation7] sm:$0xf]
    %v142 = vld [vmem:[#allocation7 + $0x4] sm:$0xf]
    %v143 = vld [vmem:[#allocation7 + $0x8] sm:$0xf]
    %v144 = vld [vmem:[#allocation7 + $0xc] sm:$0xf]
    %v145 = vld [vmem:[#allocation7 + $0x10] sm:$0xf]
    %v146 = vld [vmem:[#allocation7 + $0x14] sm:$0xf]
    %v147 = vld [vmem:[#allocation7 + $0x18] sm:$0xf]
    %v148 = vld [vmem:[#allocation7 + $0x1c] sm:$0xf]
    %v149 = vld [vmem:[#allocation7 + $0x20] sm:$0xf]
    %v150 = vld [vmem:[#allocation7 + $0x24] sm:$0xf]
    %v151 = vld [vmem:[#allocation7 + $0x28] sm:$0xf]
    %v152 = vld [vmem:[#allocation7 + $0x2c] sm:$0xf]
    %v153 = vld [vmem:[#allocation7 + $0x30] sm:$0xf]
    %v154 = vld [vmem:[#allocation7 + $0x34] sm:$0xf]
    %v155 = vld [vmem:[#allocation7 + $0x38] sm:$0xf]
    %v156 = vld [vmem:[#allocation7 + $0x3c] sm:$0xf]
    %v157 = vld [vmem:[%s4] sm:$0x1]
    %v159 = vlaneseq
    %v160 = vshrl.u32 %v159, 7
    %v161 = vsub.s32 0, %v160
    %v162 = vrot.slane %v157, %v161
    %v180 = vunpack.c.l.b16 %v141
    %v181 = vunpack.c.l.b16 %v142
    %v182 = vunpack.c.l.b16 %v143
    %v183 = vunpack.c.l.b16 %v144
    %v184 = vunpack.c.l.b16 %v145
    %v185 = vunpack.c.l.b16 %v146
    %v186 = vunpack.c.l.b16 %v147
    %v187 = vunpack.c.l.b16 %v148
    %v188 = vunpack.c.l.b16 %v149
    %v189 = vunpack.c.l.b16 %v150
    %v190 = vunpack.c.l.b16 %v151
    %v191 = vunpack.c.l.b16 %v152
    %v192 = vunpack.c.l.b16 %v153
    %v193 = vunpack.c.l.b16 %v154
    %v194 = vunpack.c.l.b16 %v155
    %v195 = vunpack.c.l.b16 %v156
    %v196 = vpack.c.b16 %v181, %v180
    %v197 = vpack.c.b16 %v183, %v182
    %v198 = vpack.c.b16 %v185, %v184
    %v199 = vpack.c.b16 %v187, %v186
    %v200 = vpack.c.b16 %v189, %v188
    %v201 = vpack.c.b16 %v191, %v190
    %v202 = vpack.c.b16 %v193, %v192
    %v203 = vpack.c.b16 %v195, %v194
    %212 = vmatprep.subr.bf16.mxu0 0
    %213 = vmatpush1.bf16.msra.mxu0 %v196
    %214 = vmatprep.subr.bf16.mxu0 0
    %215 = vmatpush1.bf16.msra.mxu0 %v197
    %216 = vmatprep.subr.bf16.mxu0 0
    %217 = vmatpush1.bf16.msra.mxu0 %v198
    %218 = vmatprep.subr.bf16.mxu0 0
    %219 = vmatpush1.bf16.msra.mxu0 %v199
    %220 = vmatprep.subr.bf16.mxu0 0
    %221 = vmatpush1.bf16.msra.mxu0 %v200
    %222 = vmatprep.subr.bf16.mxu0 0
    %223 = vmatpush1.bf16.msra.mxu0 %v201
    %224 = vmatprep.subr.bf16.mxu0 0
    %225 = vmatpush1.bf16.msra.mxu0 %v202
    %226 = vmatprep.subr.bf16.mxu0 0
    %227 = vmatpush1.bf16.msra.mxu0 %v203
    %228 = vmatprep.subr.bf16.mxu0 0
    %229 = vmatpush1.bf16.msra.mxu0 0
    %230 = vmatprep.subr.bf16.mxu0 0
    %231 = vmatpush1.bf16.msra.mxu0 0
    %232 = vmatprep.subr.bf16.mxu0 0
    %233 = vmatpush1.bf16.msra.mxu0 0
    %234 = vmatprep.subr.bf16.mxu0 0
    %235 = vmatpush1.bf16.msra.mxu0 0
    %236 = vmatprep.subr.bf16.mxu0 0
    %237 = vmatpush1.bf16.msra.mxu0 0
    %238 = vmatprep.subr.bf16.mxu0 0
    %239 = vmatpush1.bf16.msra.mxu0 0
    %240 = vmatprep.subr.bf16.mxu0 0
    %241 = vmatpush1.bf16.msra.mxu0 0
    %242 = vmatprep.subr.bf16.mxu0 0
    %243 = vmatpush1.bf16.msra.mxu0 0
    %244 = vmatprep.mubr.bf16.mxu0 0
    %245 = vmatmul.mubr.bf16.gmra.mrb[0].mxu0 %v140
    %v246 = vpop.f32.mrb[0].mxu0
    %v247 = vadd.f32 %v162, %v246
    %v248 = vpop.f32.mrb[0].mxu0
    %v249 = vpop.f32.mrb[0].mxu0
    %v250 = vadd.f32 %v162, %v249
    %v251 = vpop.f32.mrb[0].mxu0
    %252 = vdwg.mxu0
    %v253 = vxor.u32 %v247, 2147483648
    %v254 = vxor.u32 %v250, 2147483648
    %v255 = vmul.f32 %v253, 1.442695
    %v256 = vpow.pop %v255
    %v257 = vmul.f32 %v254, 1.442695
    %v258 = vpow.pop %v257
    %v259 = vadd.f32 %v256, 1.0
    %v260 = vadd.f32 %v258, 1.0
    %v261 = vrcp.pop %v259
    %v262 = vmul.f32 1.0, %v261
    %v263 = vrcp.pop %v260
    %v264 = vmul.f32 1.0, %v263
    %265 = vst [vmem:[#allocation8] sm:$0xff] %v262
    %266 = vst [vmem:[#allocation8 + $0x8] sm:$0xff] %v264
    // Predicated region
    $region34: #{tpu_custom_call.1} parent=1 // pred_check
      _
    $region35: #{tpu_custom_call.1} parent=1 // pred_check_branch
      %268 = sbr.rel (0) target = $region37
    $region36: #{tpu_custom_call.1} parent=1 // pred_region
      %s270 = ssub.s32 256, 256
      %271 = vsyncadd [#allocation4], %s270
      %s272 = sshll.u32 [#allocation8], 4
      %s273 = int_to_ptr.vmem [resolvable:$true] %s272
      %278 = dma.vmem_to_hbm [thread:$0]  %s273, 256, %s5, [#allocation4], 128, 128, 8
    $region37: #{tpu_custom_call.1} parent=1 // pred_fallthru
      _
    // Predicated region
    $region38: #{tpu_custom_call.1} parent=1 // pred_check
      _
    $region39: #{tpu_custom_call.1} parent=1 // pred_check_branch
      %280 = sbr.rel (0) target = $region41
    $region40: #{tpu_custom_call.1} parent=1 // pred_region
      %281 = dma.done [#allocation4], 256
    $region41: #{tpu_custom_call.1} parent=1 // pred_fallthru
      _
    %282 = vsyncpa [#allocation3], 1
    %283 = vsyncpa [#allocation6], 1
    %284 = vsyncpa [#allocation4], 1

// kernel: tpu_custom_call.1
$region0: #{tpu_custom_call.1}
  #allocation0 [shape = 'u32[]', space=smem, size = 0x4, offset = 0x4, fixed_abs, tag = 'smem constant byte address 0x4 - core index']
  #allocation1 [shape = 'u32[144,128]{1,0:T(1,128)}', space=vmem, size = 0x12000, scoped, tag = 'internal scratch']
  %s0 = inlined_call_operand.hbm [shape: bf16[16,32], index: 0, kind: input, shape index: {}]
  %s1 = inlined_call_operand.hbm [shape: bf16[32,128], index: 1, kind: input, shape index: {}]
  %s2 = inlined_call_operand.vmem [shape: f32[1,128], index: 2, kind: input, shape index: {}]
  %s3 = inlined_call_operand.hbm [shape: bf16[128,128], index: 3, kind: input, shape index: {}]
  %s4 = inlined_call_operand.vmem [shape: f32[1,128], index: 4, kind: input, shape index: {}]
  %s5 = inlined_call_operand.hbm [shape: f32[16,128], index: 5, kind: output, shape index: {}]
  %s6 = sld [smem:[#allocation0]]
  $region42: #{tpu_custom_call.1} parent=0
    _
  %s8 = ssub.s32 1, %s6
  %s9 = scalar_select 0, %s8, %s6
  $region1: #{tpu_custom_call.1} parent=0
    #allocation2 [shape = 'u8[4096]{0}', space=vmem, size = 0x1000, scoped, tag = 'input window, operand 0, single buffered']
    #allocation3 [shape = 's32[1]{0}', space=sflag, size = 0x4, scoped, tag = 'scoped memory for tpu_custom_call.1']
    #allocation4 [shape = 's32[1]{0}', space=sflag, size = 0x4, scoped, tag = 'scoped memory for tpu_custom_call.1']
    #allocation5 [shape = 'u8[8192]{0}', space=vmem, size = 0x2000, scoped, tag = 'input window, operand 1, single buffered']
    #allocation6 [shape = 's32[1]{0}', space=sflag, size = 0x4, scoped, tag = 'scoped memory for tpu_custom_call.1']
    #allocation7 [shape = 'u8[32768]{0}', space=vmem, size = 0x8000, scoped, tag = 'input window, operand 3, single buffered']
    #allocation8 [shape = 'u8[8192]{0}', space=vmem, size = 0x2000, scoped, tag = 'output window, operand 0, single buffered']
    %10 = vsyncpa [#allocation3], 0
    %11 = vsyncpa [#allocation6], 0
    %12 = vsyncpa [#allocation4], 0
    // Predicated region
    $region2: #{tpu_custom_call.1} parent=1 // pred_check
      _
    $region3: #{tpu_custom_call.1} parent=1 // pred_check_branch
      %14 = sbr.rel (0) target = $region5
    $region4: #{tpu_custom_call.1} parent=1 // pred_region
      %s16 = ssub.s32 128, 128
      %17 = vsyncadd [#allocation3], %s16
      %s18 = sshll.u32 [#allocation2], 4
      %s19 = int_to_ptr.vmem [resolvable:$true] %s18
      %24 = dma.hbm_to_vmem [thread:$0]  %s0, 128, %s19, [#allocation3], 64, 64, 4
    $region5: #{tpu_custom_call.1} parent=1 // pred_fallthru
      _
    // Predicated region
    $region6: #{tpu_custom_call.1} parent=1 // pred_check
      _
    $region7: #{tpu_custom_call.1} parent=1 // pred_check_branch
      %26 = sbr.rel (0) target = $region9
    $region8: #{tpu_custom_call.1} parent=1 // pred_region
      %s28 = ssub.s32 256, 256
      %29 = vsyncadd [#allocation6], %s28
      %s30 = sshll.u32 [#allocation5], 4
      %s31 = int_to_ptr.vmem [resolvable:$true] %s30
      %36 = dma.hbm_to_vmem [thread:$0]  %s1, 256, %s31, [#allocation6], 64, 64, 4
    $region9: #{tpu_custom_call.1} parent=1 // pred_fallthru
      _
    // Predicated region
    $region10: #{tpu_custom_call.1} parent=1 // pred_check
      _
    $region11: #{tpu_custom_call.1} parent=1 // pred_check_branch
      %38 = sbr.rel (0) target = $region13
    $region12: #{tpu_custom_call.1} parent=1 // pred_region
      _
    $region13: #{tpu_custom_call.1} parent=1 // pred_fallthru
      _
    // Predicated region
    $region14: #{tpu_custom_call.1} parent=1 // pred_check
      _
    $region15: #{tpu_custom_call.1} parent=1 // pred_check_branch
      %40 = sbr.rel (0) target = $region17
    $region16: #{tpu_custom_call.1} parent=1 // pred_region
      %s42 = ssub.s32 1024, 1024
      %43 = vsyncadd [#allocation6], %s42
      %s44 = sshll.u32 [#allocation7], 4
      %s45 = int_to_ptr.vmem [resolvable:$true] %s44
      %50 = dma.hbm_to_vmem [thread:$0]  %s3, 1024, %s45, [#allocation6], 64, 64, 4
    $region17: #{tpu_custom_call.1} parent=1 // pred_fallthru
      _
    // Predicated region
    $region18: #{tpu_custom_call.1} parent=1 // pred_check
      _
    $region19: #{tpu_custom_call.1} parent=1 // pred_check_branch
      %52 = sbr.rel (0) target = $region21
    $region20: #{tpu_custom_call.1} parent=1 // pred_region
      _
    $region21: #{tpu_custom_call.1} parent=1 // pred_fallthru
      _
    // Predicated region
    $region22: #{tpu_custom_call.1} parent=1 // pred_check
      _
    $region23: #{tpu_custom_call.1} parent=1 // pred_check_branch
      %54 = sbr.rel (0) target = $region25
    $region24: #{tpu_custom_call.1} parent=1 // pred_region
      %55 = dma.done [#allocation3], 128
    $region25: #{tpu_custom_call.1} parent=1 // pred_fallthru
      _
    // Predicated region
    $region26: #{tpu_custom_call.1} parent=1 // pred_check
      _
    $region27: #{tpu_custom_call.1} parent=1 // pred_check_branch
      %57 = sbr.rel (0) target = $region29
    $region28: #{tpu_custom_call.1} parent=1 // pred_region
      %58 = dma.done [#allocation6], 256
    $region29: #{tpu_custom_call.1} parent=1 // pred_fallthru
      _
    // Predicated region
    $region30: #{tpu_custom_call.1} parent=1 // pred_check
      _
    $region31: #{tpu_custom_call.1} parent=1 // pred_check_branch
      %60 = sbr.rel (0) target = $region33
    $region32: #{tpu_custom_call.1} parent=1 // pred_region
      %61 = dma.done [#allocation6], 1024
    $region33: #{tpu_custom_call.1} parent=1 // pred_fallthru
      _
    %v63 = vld [vmem:[#allocation2] sm:$0xf]
    %v64 = vld [vmem:[#allocation2 + $0x4] sm:$0xf]
    %v65 = vld [vmem:[#allocation5] sm:$0xf]
    %v66 = vld [vmem:[#allocation5 + $0x4] sm:$0xf]
    %v67 = vld [vmem:[#allocation5 + $0x8] sm:$0xf]
    %v68 = vld [vmem:[#allocation5 + $0xc] sm:$0xf]
    %v69 = vld [vmem:[%s2] sm:$0x1]
    %v71 = vlaneseq
    %v72 = vshrl.u32 %v71, 7
    %v73 = vsub.s32 0, %v72
    %v74 = vrot.slane %v69, %v73
    %v78 = vunpack.c.l.b16 %v63
    %v79 = vunpack.c.l.b16 %v64
    %v80 = vpack.c.b16 %v79, %v78
    %v85 = vunpack.c.l.b16 %v65
    %v86 = vunpack.c.l.b16 %v66
    %v87 = vunpack.c.l.b16 %v67
    %v88 = vunpack.c.l.b16 %v68
    %v89 = vpack.c.b16 %v86, %v85
    %v90 = vpack.c.b16 %v88, %v87
    %vm93 = vcmask 261120
    %v95 = vsel %vm93, %v80, 0
    %97 = vmatprep.subr.bf16.mxu0 0
    %98 = vmatpush1.bf16.msra.mxu0 %v89
    %99 = vmatprep.subr.bf16.mxu0 0
    %100 = vmatpush1.bf16.msra.mxu0 %v90
    %101 = vmatprep.subr.bf16.mxu0 0
    %102 = vmatpush1.bf16.msra.mxu0 0
    %103 = vmatprep.subr.bf16.mxu0 0
    %104 = vmatpush1.bf16.msra.mxu0 0
    %105 = vmatprep.subr.bf16.mxu0 0
    %106 = vmatpush1.bf16.msra.mxu0 0
    %107 = vmatprep.subr.bf16.mxu0 0
    %108 = vmatpush1.bf16.msra.mxu0 0
    %109 = vmatprep.subr.bf16.mxu0 0
    %110 = vmatpush1.bf16.msra.mxu0 0
    %111 = vmatprep.subr.bf16.mxu0 0
    %112 = vmatpush1.bf16.msra.mxu0 0
    %113 = vmatprep.subr.bf16.mxu0 0
    %114 = vmatpush1.bf16.msra.mxu0 0
    %115 = vmatprep.subr.bf16.mxu0 0
    %116 = vmatpush1.bf16.msra.mxu0 0
    %117 = vmatprep.subr.bf16.mxu0 0
    %118 = vmatpush1.bf16.msra.mxu0 0
    %119 = vmatprep.subr.bf16.mxu0 0
    %120 = vmatpush1.bf16.msra.mxu0 0
    %121 = vmatprep.subr.bf16.mxu0 0
    %122 = vmatpush1.bf16.msra.mxu0 0
    %123 = vmatprep.subr.bf16.mxu0 0
    %124 = vmatpush1.bf16.msra.mxu0 0
    %125 = vmatprep.subr.bf16.mxu0 0
    %126 = vmatpush1.bf16.msra.mxu0 0
    %127 = vmatprep.subr.bf16.mxu0 0
    %128 = vmatpush1.bf16.msra.mxu0 0
    %129 = vmatprep.mubr.bf16.mxu0 0
    %130 = vmatmul.mubr.bf16.gmra.mrb[0].mxu0 %v95
    %v131 = vpop.f32.mrb[0].mxu0
    %v132 = vadd.f32 %v74, %v131
    %v133 = vpop.f32.mrb[0].mxu0
    %v134 = vpop.f32.mrb[0].mxu0
    %v135 = vadd.f32 %v74, %v134
    %v136 = vpop.f32.mrb[0].mxu0
    %137 = vdwg.mxu0
    %v138 = vmax.f32 %v132, 0.0
    %v139 = vmax.f32 %v135, 0.0
    %v140 = vpack.c.bf16 %v139, %v138
    %v141 = vld [vmem:[#allocation7] sm:$0xf]
    %v142 = vld [vmem:[#allocation7 + $0x4] sm:$0xf]
    %v143 = vld [vmem:[#allocation7 + $0x8] sm:$0xf]
    %v144 = vld [vmem:[#allocation7 + $0xc] sm:$0xf]
    %v145 = vld [vmem:[#allocation7 + $0x10] sm:$0xf]
    %v146 = vld [vmem:[#allocation7 + $0x14] sm:$0xf]
    %v147 = vld [vmem:[#allocation7 + $0x18] sm:$0xf]
    %v148 = vld [vmem:[#allocation7 + $0x1c] sm:$0xf]
    %v149 = vld [vmem:[#allocation7 + $0x20] sm:$0xf]
    %v150 = vld [vmem:[#allocation7 + $0x24] sm:$0xf]
    %v151 = vld [vmem:[#allocation7 + $0x28] sm:$0xf]
    %v152 = vld [vmem:[#allocation7 + $0x2c] sm:$0xf]
    %v153 = vld [vmem:[#allocation7 + $0x30] sm:$0xf]
    %v154 = vld [vmem:[#allocation7 + $0x34] sm:$0xf]
    %v155 = vld [vmem:[#allocation7 + $0x38] sm:$0xf]
    %v156 = vld [vmem:[#allocation7 + $0x3c] sm:$0xf]
    %v157 = vld [vmem:[%s4] sm:$0x1]
    %v159 = vlaneseq
    %v160 = vshrl.u32 %v159, 7
    %v161 = vsub.s32 0, %v160
    %v162 = vrot.slane %v157, %v161
    %v180 = vunpack.c.l.b16 %v141
    %v181 = vunpack.c.l.b16 %v142
    %v182 = vunpack.c.l.b16 %v143
    %v183 = vunpack.c.l.b16 %v144
    %v184 = vunpack.c.l.b16 %v145
    %v185 = vunpack.c.l.b16 %v146
    %v186 = vunpack.c.l.b16 %v147
    %v187 = vunpack.c.l.b16 %v148
    %v188 = vunpack.c.l.b16 %v149
    %v189 = vunpack.c.l.b16 %v150
    %v190 = vunpack.c.l.b16 %v151
    %v191 = vunpack.c.l.b16 %v152
    %v192 = vunpack.c.l.b16 %v153
    %v193 = vunpack.c.l.b16 %v154
    %v194 = vunpack.c.l.b16 %v155
    %v195 = vunpack.c.l.b16 %v156
    %v196 = vpack.c.b16 %v181, %v180
    %v197 = vpack.c.b16 %v183, %v182
    %v198 = vpack.c.b16 %v185, %v184
    %v199 = vpack.c.b16 %v187, %v186
    %v200 = vpack.c.b16 %v189, %v188
    %v201 = vpack.c.b16 %v191, %v190
    %v202 = vpack.c.b16 %v193, %v192
    %v203 = vpack.c.b16 %v195, %v194
    %212 = vmatprep.subr.bf16.mxu0 0
    %213 = vmatpush1.bf16.msra.mxu0 %v196
    %214 = vmatprep.subr.bf16.mxu0 0
    %215 = vmatpush1.bf16.msra.mxu0 %v197
    %216 = vmatprep.subr.bf16.mxu0 0
    %217 = vmatpush1.bf16.msra.mxu0 %v198
    %218 = vmatprep.subr.bf16.mxu0 0
    %219 = vmatpush1.bf16.msra.mxu0 %v199
    %220 = vmatprep.subr.bf16.mxu0 0
    %221 = vmatpush1.bf16.msra.mxu0 %v200
    %222 = vmatprep.subr.bf16.mxu0 0
    %223 = vmatpush1.bf16.msra.mxu0 %v201
    %224 = vmatprep.subr.bf16.mxu0 0
    %225 = vmatpush1.bf16.msra.mxu0 %v202
    %226 = vmatprep.subr.bf16.mxu0 0
    %227 = vmatpush1.bf16.msra.mxu0 %v203
    %228 = vmatprep.subr.bf16.mxu0 0
    %229 = vmatpush1.bf16.msra.mxu0 0
    %230 = vmatprep.subr.bf16.mxu0 0
    %231 = vmatpush1.bf16.msra.mxu0 0
    %232 = vmatprep.subr.bf16.mxu0 0
    %233 = vmatpush1.bf16.msra.mxu0 0
    %234 = vmatprep.subr.bf16.mxu0 0
    %235 = vmatpush1.bf16.msra.mxu0 0
    %236 = vmatprep.subr.bf16.mxu0 0
    %237 = vmatpush1.bf16.msra.mxu0 0
    %238 = vmatprep.subr.bf16.mxu0 0
    %239 = vmatpush1.bf16.msra.mxu0 0
    %240 = vmatprep.subr.bf16.mxu0 0
    %241 = vmatpush1.bf16.msra.mxu0 0
    %242 = vmatprep.subr.bf16.mxu0 0
    %243 = vmatpush1.bf16.msra.mxu0 0
    %244 = vmatprep.mubr.bf16.mxu0 0
    %245 = vmatmul.mubr.bf16.gmra.mrb[0].mxu0 %v140
    %v246 = vpop.f32.mrb[0].mxu0
    %v247 = vadd.f32 %v162, %v246
    %v248 = vpop.f32.mrb[0].mxu0
    %v249 = vpop.f32.mrb[0].mxu0
    %v250 = vadd.f32 %v162, %v249
    %v251 = vpop.f32.mrb[0].mxu0
    %252 = vdwg.mxu0
    %v253 = vxor.u32 %v247, 2147483648
    %v254 = vxor.u32 %v250, 2147483648
    %v255 = vmul.f32 %v253, 1.442695
    %v256 = vpow.pop %v255
    %v257 = vmul.f32 %v254, 1.442695
    %v258 = vpow.pop %v257
    %v259 = vadd.f32 %v256, 1.0
    %v260 = vadd.f32 %v258, 1.0
    %v261 = vrcp.pop %v259
    %v262 = vmul.f32 1.0, %v261
    %v263 = vrcp.pop %v260
    %v264 = vmul.f32 1.0, %v263
    %265 = vst [vmem:[#allocation8] sm:$0xff] %v262
    %266 = vst [vmem:[#allocation8 + $0x8] sm:$0xff] %v264
    // Predicated region
    $region34: #{tpu_custom_call.1} parent=1 // pred_check
      _
    $region35: #{tpu_custom_call.1} parent=1 // pred_check_branch
      %268 = sbr.rel (0) target = $region37
    $region36: #{tpu_custom_call.1} parent=1 // pred_region
      %s270 = ssub.s32 256, 256
      %271 = vsyncadd [#allocation4], %s270
      %s272 = sshll.u32 [#allocation8], 4
      %s273 = int_to_ptr.vmem [resolvable:$true] %s272
      %278 = dma.vmem_to_hbm [thread:$0]  %s273, 256, %s5, [#allocation4], 128, 128, 8
    $region37: #{tpu_custom_call.1} parent=1 // pred_fallthru
      _
    // Predicated region
    $region38: #{tpu_custom_call.1} parent=1 // pred_check
      _
    $region39: #{tpu_custom_call.1} parent=1 // pred_check_branch
      %280 = sbr.rel (0) target = $region41
    $region40: #{tpu_custom_call.1} parent=1 // pred_region
      %281 = dma.done [#allocation4], 256
    $region41: #{tpu_custom_call.1} parent=1 // pred_fallthru
      _
    %282 = vsyncpa [#allocation3], 1
    %283 = vsyncpa [#allocation6], 1
    %284 = vsyncpa [#allocation4], 1

</llo_original>
